<compile_context>
chip_gen: v7x
topology: tpu7x:2x2x1
jax: 0.10.0
libtpu: 0.0.40
codegen_flags: <defaults>
</compile_context>

<pallas_src>
import jax
import jax.numpy as jnp
from jax.experimental import pallas as pl
from jax.experimental.pallas import tpu as pltpu

MARGIN_BASE = 2.0  # module __init__ default; single-forward margin = max(2.0, mean+std)


def _pick_anchor_block(batch):
    for tm in (256, 128, 64, 32, 16, 8):
        if batch % tm == 0:
            return tm
    return batch  # full dim is always a legal block


def _pick_pair_block(batch):
    for tn in (1024, 512, 256, 128):
        if batch % tn == 0:
            return tn
    return batch  # full dim is always a legal block (no 128-alignment needed then)


def _vmem_budget(tm, tn, d):
    """Rough per-step footprint with headroom: streamed blocks (x2 buffers),
    ~8 live [TM,TN] f32/i32 temps, and lane/sublane padding of the narrow arrays."""
    stream = 2 * (tm * d + d * tn) * 4 * 2
    tiles = 8 * tm * tn * 4
    narrow = 4 * (tm * 128 + 8 * tn) * 4   # [.,1]/[1,.] inputs + outputs, padded
    est = stream + tiles + narrow + (1 << 20)
    try:
        cap = int(pltpu.get_tpu_info().vmem_capacity_bytes)
    except Exception:
        cap = 64 * 1024 * 1024             # conservative (v7x per-TC capacity)
    return int(min(3 * cap // 4, max(16 * 1024 * 1024, 2 * est)))


def triplet_loss(embeddings, labels, *, block_rows=None, block_cols=None,
                 return_parts=False):
    """embeddings: [B, D] float32 (normalized), labels: [B] int -> scalar f32 loss."""
    e = embeddings.astype(jnp.float32)
    B, D = e.shape

    TM = _pick_anchor_block(B) if block_rows is None else int(block_rows)
    TN = _pick_pair_block(B) if block_cols is None else int(block_cols)
    assert B % TM == 0 and (TM == B or TM % 8 == 0), "anchor block must divide B, 8-aligned"
    assert B % TN == 0 and (TN == B or TN % 128 == 0), "pair block must divide B, 128-aligned"

    eT = jnp.transpose(e)                      # [D, B] natural MXU rhs layout
    sq = jnp.sum(e * e, axis=1)                # [B] row squared norms (wrapper-side)
    sqa = sq.reshape(B, 1)
    sqf = sq.reshape(1, B)
    labc = labels.reshape(B, 1).astype(jnp.int32)
    labr = labels.reshape(1, B).astype(jnp.int32)

    def kernel(xa_ref, xt_ref, sqa_ref, sqf_ref, labc_ref, labr_ref,
               hp_ref, dsum_ref):
        i = pl.program_id(0)                   # anchor block (parallel)
        j = pl.program_id(1)                   # pair block (reduction / arbitrary)

        # pairwise distances for this [TM, TN] tile: ||a||^2 + ||b||^2 - 2<a,b>
        gram = jnp.dot(xa_ref[...], xt_ref[...],
                       preferred_element_type=jnp.float32)               # [TM, TN]
        d2 = jnp.maximum(sqa_ref[...] + sqf_ref[...] - 2.0 * gram, 0.0)
        dist = jnp.sqrt(d2)

        # anchor-positive mask: same label, excluding the self-pair diagonal
        row_ids = jax.lax.broadcasted_iota(jnp.int32, (TM, TN), 0) + i * TM
        col_ids = jax.lax.broadcasted_iota(jnp.int32, (TM, TN), 1) + j * TN
        pos_mask = jnp.logical_and(labc_ref[...] == labr_ref[...],
                                   row_ids != col_ids)

        # where(mask, dist, 0) == dist * mask.float() since dist >= 0 (torch semantics)
        tile_hp = jnp.max(jnp.where(pos_mask, dist, 0.0), axis=1, keepdims=True)  # [TM,1]
        tile_sum = jnp.sum(dist, axis=1, keepdims=True)                           # [TM,1]

        @pl.when(j == 0)
        def _init():
            hp_ref[...] = jnp.zeros_like(hp_ref)
            dsum_ref[...] = jnp.zeros_like(dsum_ref)

        hp_ref[...] = jnp.maximum(hp_ref[...], tile_hp)
        dsum_ref[...] = dsum_ref[...] + tile_sum

    hp_col, dsum_col = pl.pallas_call(
        kernel,
        out_shape=(jax.ShapeDtypeStruct((B, 1), jnp.float32),
                   jax.ShapeDtypeStruct((B, 1), jnp.float32)),
        grid=(B // TM, B // TN),
        in_specs=[
            pl.BlockSpec((TM, D), lambda i, j: (i, 0)),   # anchor rows
            pl.BlockSpec((D, TN), lambda i, j: (0, j)),   # pair columns (pre-transposed)
            pl.BlockSpec((TM, 1), lambda i, j: (i, 0)),   # anchor squared norms
            pl.BlockSpec((1, TN), lambda i, j: (0, j)),   # pair squared norms
            pl.BlockSpec((TM, 1), lambda i, j: (i, 0)),   # anchor labels
            pl.BlockSpec((1, TN), lambda i, j: (0, j)),   # pair labels
        ],
        out_specs=[
            pl.BlockSpec((TM, 1), lambda i, j: (i, 0)),   # hardest positive per anchor
            pl.BlockSpec((TM, 1), lambda i, j: (i, 0)),   # row-sum of distances per anchor
        ],
        compiler_params=pltpu.CompilerParams(
            dimension_semantics=("parallel", "arbitrary"),
            vmem_limit_bytes=_vmem_budget(TM, TN, D),
        ),
    )(e, eT, sqa, sqf, labc, labr)

    # ---- tiny O(B) scalar epilogue in plain JAX (core-safe for megacore splits) ----
    hp = hp_col[:, 0]
    n = jnp.float32(B * B)
    sum_d = jnp.sum(dsum_col)
    s = jnp.sum(e, axis=0)
    sum_d2 = 2.0 * B * jnp.sum(sq) - 2.0 * jnp.dot(s, s)   # algebraic sum of d^2
    mean_d = sum_d / n
    var = jnp.maximum((sum_d2 - n * mean_d * mean_d) / (n - 1.0), 0.0)  # unbiased
    margin = jnp.maximum(mean_d + jnp.sqrt(var), jnp.float32(MARGIN_BASE))

    # hardest negative is provably 0 under the module's multiply-mask (the same-label
    # diagonal is masked to 0 and dist >= 0), so its computation is elided entirely.
    hn = jnp.float32(0.0)
    any_hard = jnp.any((hn - hp) >= margin)
    loss_vec = jnp.maximum(hp - hn + margin, 0.0)
    num_valid = jnp.sum((loss_vec > 1e-16).astype(jnp.float32))
    loss = jnp.where(num_valid > 0, jnp.mean(loss_vec), jnp.float32(0.0))
    # TODO(synk): the torch module also print()s "Warning: No hard triplets found!" and
    # mutates self.margin across calls; neither side effect is reproduced here.
    loss = jnp.where(any_hard, loss, jnp.float32(0.0))

    if return_parts:
        return loss, hp, margin
    return loss


def triplet_loss_ref(embeddings, labels, return_parts=False):
    """Pure-JAX reference mirroring the PyTorch forward (multiply-mask semantics)."""
    e = embeddings.astype(jnp.float32)
    B = e.shape[0]
    diff = e[:, None, :] - e[None, :, :]
    dist = jnp.sqrt(jnp.maximum(jnp.sum(diff * diff, axis=-1), 0.0))
    mean_d = dist.mean()
    std_d = jnp.sqrt(jnp.sum((dist - mean_d) ** 2) / (B * B - 1))
    margin = jnp.maximum(mean_d + std_d, MARGIN_BASE)
    same = labels[None, :] == labels[:, None]
    eye = jnp.eye(B, dtype=bool)
    hp = jnp.max(dist * (same & ~eye).astype(jnp.float32), axis=1)
    hn = jnp.min(dist * (~same).astype(jnp.float32), axis=1)
    any_hard = jnp.any((hn - hp) >= margin)
    loss_vec = jnp.maximum(hp - hn + margin, 0.0)
    num_valid = jnp.sum((loss_vec > 1e-16).astype(jnp.float32))
    loss = jnp.where(num_valid > 0, loss_vec.mean(), 0.0)
    loss = jnp.where(any_hard, loss, 0.0)
    if return_parts:
        return loss, hp, margin
    return loss


if __name__ == "__main__":
    key = jax.random.PRNGKey(0)
    k_emb, k_lab, k_emb3, k_lab3 = jax.random.split(key, 4)

    def run_case(emb, labels, **kw):
        loss, hp, margin = triplet_loss(emb, labels, return_parts=True, **kw)
        jax.block_until_ready((loss, hp, margin))
        rloss, rhp, rmargin = triplet_loss_ref(emb, labels, return_parts=True)
        assert jnp.allclose(hp, rhp, atol=1e-4), (hp, rhp)
        assert jnp.allclose(margin, rmargin, atol=2e-3), (margin, rmargin)
        assert jnp.allclose(loss, rloss, atol=1e-5), (loss, rloss)

    # case 1: two anchor blocks, single pair block (grid (2, 1))
    B, D = 16, 32
    emb = jax.random.normal(k_emb, (B, D), dtype=jnp.float32)
    emb = emb / jnp.linalg.norm(emb, axis=-1, keepdims=True)   # module expects normalized
    labels = jax.random.randint(k_lab, (B,), 0, 3, dtype=jnp.int32)
    run_case(emb, labels, block_rows=8)

    # case 2: monolithic (grid (1, 1))
    run_case(emb[:8], labels[:8])

    # case 3: both axes tiled with lane-aligned pair blocks (grid (2, 2))
    B3, D3 = 256, 16
    emb3 = jax.random.normal(k_emb3, (B3, D3), dtype=jnp.float32)
    emb3 = emb3 / jnp.linalg.norm(emb3, axis=-1, keepdims=True)
    labels3 = jax.random.randint(k_lab3, (B3,), 0, 8, dtype=jnp.int32)
    run_case(emb3, labels3, block_rows=128, block_cols=128)

    print("KERNEL_OK")
</pallas_src>

<mosaic_0001>
module attributes {stable_mosaic.version = 11 : i64} {
  func.func @kernel(%arg0: i32, %arg1: i32, %arg2: memref<8x32xf32, #tpu.memory_space<vmem>>, %arg3: memref<32x16xf32, #tpu.memory_space<vmem>>, %arg4: memref<8x1xf32, #tpu.memory_space<vmem>>, %arg5: memref<1x16xf32, #tpu.memory_space<vmem>>, %arg6: memref<8x1xi32, #tpu.memory_space<vmem>>, %arg7: memref<1x16xi32, #tpu.memory_space<vmem>>, %arg8: memref<8x1xf32, #tpu.memory_space<vmem>>, %arg9: memref<8x1xf32, #tpu.memory_space<vmem>>) attributes {dimension_semantics = [#tpu.dimension_semantics<parallel>, #tpu.dimension_semantics<arbitrary>], iteration_bounds = array<i64: 2, 1>, scalar_prefetch = 0 : i64, scratch_operands = 0 : i64, tpu.core_type = #tpu.core_type<tc>, window_params = [{transform_indices = @transform_0, window_bounds = array<i64: 8, 32>}, {transform_indices = @transform_1, window_bounds = array<i64: 32, 16>}, {transform_indices = @transform_2, window_bounds = array<i64: 8, 1>}, {transform_indices = @transform_3, window_bounds = array<i64: 1, 16>}, {transform_indices = @transform_4, window_bounds = array<i64: 8, 1>}, {transform_indices = @transform_5, window_bounds = array<i64: 1, 16>}, {transform_indices = @transform_6, window_bounds = array<i64: 8, 1>}, {transform_indices = @transform_7, window_bounds = array<i64: 8, 1>}]} {
    %c0 = arith.constant 0 : index
    %c0_0 = arith.constant 0 : index
    %0 = vector.load %arg2[%c0, %c0_0] : memref<8x32xf32, #tpu.memory_space<vmem>>, vector<8x32xf32>
    %c0_1 = arith.constant 0 : index
    %c0_2 = arith.constant 0 : index
    %1 = vector.load %arg3[%c0_1, %c0_2] : memref<32x16xf32, #tpu.memory_space<vmem>>, vector<32x16xf32>
    %cst = arith.constant dense<0.000000e+00> : vector<8x16xf32>
    %2 = tpu.matmul %0, %1, %cst {dimension_numbers = #tpu.dot_dimension_numbers<[1], [0], [0], [1], [0, 0, 1, 1], [], []>} : vector<8x32xf32>, vector<32x16xf32>, vector<8x16xf32> -> vector<8x16xf32>
    %c0_3 = arith.constant 0 : index
    %c0_4 = arith.constant 0 : index
    %3 = vector.load %arg4[%c0_3, %c0_4] : memref<8x1xf32, #tpu.memory_space<vmem>>, vector<8x1xf32>
    %c0_5 = arith.constant 0 : index
    %c0_6 = arith.constant 0 : index
    %4 = vector.load %arg5[%c0_5, %c0_6] : memref<1x16xf32, #tpu.memory_space<vmem>>, vector<1x16xf32>
    %5 = vector.broadcast %3 : vector<8x1xf32> to vector<8x16xf32>
    %6 = vector.broadcast %4 : vector<1x16xf32> to vector<8x16xf32>
    %7 = arith.addf %5, %6 : vector<8x16xf32>
    %cst_7 = arith.constant 2.000000e+00 : f32
    %8 = vector.broadcast %cst_7 : f32 to vector<8x16xf32>
    %9 = arith.mulf %8, %2 : vector<8x16xf32>
    %10 = arith.subf %7, %9 : vector<8x16xf32>
    %cst_8 = arith.constant 0.000000e+00 : f32
    %11 = vector.broadcast %cst_8 : f32 to vector<8x16xf32>
    %12 = arith.maximumf %10, %11 : vector<8x16xf32>
    %13 = math.sqrt %12 : vector<8x16xf32>
    %14 = tpu.iota {dimensions = array<i32: 0>} : vector<8x16xi32>
    %c8_i32 = arith.constant 8 : i32
    %15 = arith.muli %arg0, %c8_i32 : i32
    %16 = vector.broadcast %15 : i32 to vector<8x16xi32>
    %17 = arith.addi %14, %16 : vector<8x16xi32>
    %18 = tpu.iota {dimensions = array<i32: 1>} : vector<8x16xi32>
    %c16_i32 = arith.constant 16 : i32
    %19 = arith.muli %arg1, %c16_i32 : i32
    %20 = vector.broadcast %19 : i32 to vector<8x16xi32>
    %21 = arith.addi %18, %20 : vector<8x16xi32>
    %c0_9 = arith.constant 0 : index
    %c0_10 = arith.constant 0 : index
    %22 = vector.load %arg6[%c0_9, %c0_10] : memref<8x1xi32, #tpu.memory_space<vmem>>, vector<8x1xi32>
    %c0_11 = arith.constant 0 : index
    %c0_12 = arith.constant 0 : index
    %23 = vector.load %arg7[%c0_11, %c0_12] : memref<1x16xi32, #tpu.memory_space<vmem>>, vector<1x16xi32>
    %24 = vector.broadcast %22 : vector<8x1xi32> to vector<8x16xi32>
    %25 = vector.broadcast %23 : vector<1x16xi32> to vector<8x16xi32>
    %26 = arith.cmpi eq, %24, %25 : vector<8x16xi32>
    %27 = arith.cmpi ne, %17, %21 : vector<8x16xi32>
    %28 = arith.andi %26, %27 : vector<8x16xi1>
    %cst_13 = arith.constant 0.000000e+00 : f32
    %29 = vector.broadcast %cst_13 : f32 to vector<8x16xf32>
    %30 = arith.select %28, %13, %29 : vector<8x16xi1>, vector<8x16xf32>
    %cst_14 = arith.constant dense<0xFF800000> : vector<8xf32>
    %31 = vector.multi_reduction <maximumf>, %30, %cst_14 [1] : vector<8x16xf32> to vector<8xf32>
    %32 = vector.shape_cast %31 : vector<8xf32> to vector<8x1xf32>
    %cst_15 = arith.constant dense<0.000000e+00> : vector<8xf32>
    %33 = vector.multi_reduction <add>, %13, %cst_15 [1] : vector<8x16xf32> to vector<8xf32>
    %34 = vector.shape_cast %33 : vector<8xf32> to vector<8x1xf32>
    %c0_i32 = arith.constant 0 : i32
    %35 = arith.cmpi eq, %arg1, %c0_i32 : i32
    %36 = arith.extui %35 : i1 to i32
    %c0_i32_16 = arith.constant 0 : i32
    %37 = arith.cmpi ne, %36, %c0_i32_16 : i32
    scf.if %37 {
      %cst_25 = arith.constant 0.000000e+00 : f32
      %44 = vector.broadcast %cst_25 : f32 to vector<8x1xf32>
      %c0_26 = arith.constant 0 : index
      %c0_27 = arith.constant 0 : index
      %45 = vector.load %arg8[%c0_26, %c0_27] : memref<8x1xf32, #tpu.memory_space<vmem>>, vector<8x1xf32>
      tpu.vector_store %arg8[%c0_26, %c0_27], %44 {strides = array<i32>} : memref<8x1xf32, #tpu.memory_space<vmem>>, vector<8x1xf32>,
      %cst_28 = arith.constant 0.000000e+00 : f32
      %46 = vector.broadcast %cst_28 : f32 to vector<8x1xf32>
      %c0_29 = arith.constant 0 : index
      %c0_30 = arith.constant 0 : index
      %47 = vector.load %arg9[%c0_29, %c0_30] : memref<8x1xf32, #tpu.memory_space<vmem>>, vector<8x1xf32>
      tpu.vector_store %arg9[%c0_29, %c0_30], %46 {strides = array<i32>} : memref<8x1xf32, #tpu.memory_space<vmem>>, vector<8x1xf32>,
    } else {
    }
    %c0_17 = arith.constant 0 : index
    %c0_18 = arith.constant 0 : index
    %38 = vector.load %arg8[%c0_17, %c0_18] : memref<8x1xf32, #tpu.memory_space<vmem>>, vector<8x1xf32>
    %39 = arith.maximumf %38, %32 : vector<8x1xf32>
    %c0_19 = arith.constant 0 : index
    %c0_20 = arith.constant 0 : index
    %40 = vector.load %arg8[%c0_19, %c0_20] : memref<8x1xf32, #tpu.memory_space<vmem>>, vector<8x1xf32>
    tpu.vector_store %arg8[%c0_19, %c0_20], %39 {strides = array<i32>} : memref<8x1xf32, #tpu.memory_space<vmem>>, vector<8x1xf32>,
    %c0_21 = arith.constant 0 : index
    %c0_22 = arith.constant 0 : index
    %41 = vector.load %arg9[%c0_21, %c0_22] : memref<8x1xf32, #tpu.memory_space<vmem>>, vector<8x1xf32>
    %42 = arith.addf %41, %34 : vector<8x1xf32>
    %c0_23 = arith.constant 0 : index
    %c0_24 = arith.constant 0 : index
    %43 = vector.load %arg9[%c0_23, %c0_24] : memref<8x1xf32, #tpu.memory_space<vmem>>, vector<8x1xf32>
    tpu.vector_store %arg9[%c0_23, %c0_24], %42 {strides = array<i32>} : memref<8x1xf32, #tpu.memory_space<vmem>>, vector<8x1xf32>,
    return
  }
  func.func @transform_0(%arg0: i32, %arg1: i32) -> (i32, i32) {
    %c0_i32 = arith.constant 0 : i32
    %c0_i32_0 = arith.constant 0 : i32
    return %arg0, %c0_i32 : i32, i32
  }
  func.func @transform_1(%arg0: i32, %arg1: i32) -> (i32, i32) {
    %c0_i32 = arith.constant 0 : i32
    %c0_i32_0 = arith.constant 0 : i32
    return %c0_i32, %arg1 : i32, i32
  }
  func.func @transform_2(%arg0: i32, %arg1: i32) -> (i32, i32) {
    %c0_i32 = arith.constant 0 : i32
    %c0_i32_0 = arith.constant 0 : i32
    return %arg0, %c0_i32 : i32, i32
  }
  func.func @transform_3(%arg0: i32, %arg1: i32) -> (i32, i32) {
    %c0_i32 = arith.constant 0 : i32
    %c0_i32_0 = arith.constant 0 : i32
    return %c0_i32, %arg1 : i32, i32
  }
  func.func @transform_4(%arg0: i32, %arg1: i32) -> (i32, i32) {
    %c0_i32 = arith.constant 0 : i32
    %c0_i32_0 = arith.constant 0 : i32
    return %arg0, %c0_i32 : i32, i32
  }
  func.func @transform_5(%arg0: i32, %arg1: i32) -> (i32, i32) {
    %c0_i32 = arith.constant 0 : i32
    %c0_i32_0 = arith.constant 0 : i32
    return %c0_i32, %arg1 : i32, i32
  }
  func.func @transform_6(%arg0: i32, %arg1: i32) -> (i32, i32) {
    %c0_i32 = arith.constant 0 : i32
    %c0_i32_0 = arith.constant 0 : i32
    return %arg0, %c0_i32 : i32, i32
  }
  func.func @transform_7(%arg0: i32, %arg1: i32) -> (i32, i32) {
    %c0_i32 = arith.constant 0 : i32
    %c0_i32_0 = arith.constant 0 : i32
    return %arg0, %c0_i32 : i32, i32
  }
}

</mosaic_0001>

<llo_original>
// kernel: tpu_custom_call.1
$region0: #{tpu_custom_call.1}
  #allocation0 [shape = 'u32[]', space=smem, size = 0x4, offset = 0x4, fixed_abs, tag = 'smem constant byte address 0x4 - core index']
  #allocation1 [shape = 'u32[144,128]{1,0:T(1,128)}', space=vmem, size = 0x12000, scoped, tag = 'internal scratch']
  %s0 = inlined_call_operand.vmem [shape: f32[16,32], index: 0, kind: input, shape index: {}]
  %s1 = inlined_call_operand.vmem [shape: f32[32,16], index: 1, kind: input, shape index: {}]
  %s2 = inlined_call_operand.vmem [shape: f32[16,1], index: 2, kind: input, shape index: {}]
  %s3 = inlined_call_operand.vmem [shape: f32[1,16], index: 3, kind: input, shape index: {}]
  %s4 = inlined_call_operand.vmem [shape: s32[16,1], index: 4, kind: input, shape index: {}]
  %s5 = inlined_call_operand.vmem [shape: s32[1,16], index: 5, kind: input, shape index: {}]
  %s6 = inlined_call_operand.vmem [shape: f32[16,1], index: 6, kind: output, shape index: {0}]
  %s7 = inlined_call_operand.vmem [shape: f32[16,1], index: 7, kind: output, shape index: {1}]
  %8 = xla_tuple %s6, %s7
  %s9 = sld [smem:[#allocation0]]
  $region69: #{tpu_custom_call.1} parent=0
    _
  %s11 = ssub.s32 1, %s9
  %s12 = scalar_select 0, %s11, %s9
  loop: start=0, step=1, limit=4
  $region2: #{tpu_custom_call.1} parent=0 // loop_pre_header
    _
  $region3: #{tpu_custom_call.1} parent=0 // loop_header
    %s14 = sphi 0, %s18
    %p15 = scmp.ge.s32.totalorder %s14, 4
    %s21 = sphi 0, %s33
    %s22 = sphi 0, %s29
    %s23 = sphi 0, %s21
    %s24 = sphi 0, %s22
    %s25 = sphi 0, %s23
    %s26 = sphi 0, %s24
    %s36 = sphi 0, %s38
    %s39 = sphi 0, %s36
    %s40 = sphi 0, %s39
    %s56 = sphi 0, %s40
    %s62 = sphi 0, %s64
    %s65 = sphi 0, %s62
    %s66 = sphi 0, %s65
    %s82 = sphi 0, %s66
    %s88 = sphi 0, %s90
    %s91 = sphi 0, %s88
    %s92 = sphi 0, %s91
    %s108 = sphi 0, %s92
    %s114 = sphi 0, %s116
    %s117 = sphi 0, %s114
    %s118 = sphi 0, %s117
    %s134 = sphi 0, %s118
    %s140 = sphi 0, %s142
    %s143 = sphi 0, %s140
    %s144 = sphi 0, %s143
    %s160 = sphi 0, %s144
    %s166 = sphi 0, %s168
    %s169 = sphi 0, %s166
    %s170 = sphi 0, %s169
    %s186 = sphi 0, %s170
    %s192 = sphi 0, %s194
    %s195 = sphi 0, %s192
    %s196 = sphi 0, %s195
    %s212 = sphi 0, %s196
    %s218 = sphi 0, %s220
    %s221 = sphi 0, %s218
    %s222 = sphi 0, %s221
    %s238 = sphi 0, %s222
  $region4: #{tpu_custom_call.1} parent=0 // loop_header_branch
    %17 = sbr.rel (%p15) target = $region8
  $region5: #{tpu_custom_call.1} parent=0 // loop_body
    %s19 = ssub.s32 %s14, 1
    %s20 = ssub.s32 %s14, 2
    %s27 = sadd.s32 1, %s22
    %p28 = scmp.ge.s32.totalorder %s27, 1
    %s29 = scalar_select %p28, 0, %s27
    %s30 = sadd.s32 1, %s21
    %s31 = scalar_select %p28, %s30, %s21
    %p32 = scmp.ge.s32.totalorder %s31, 2
    %s33 = scalar_select %p32, 0, %s31
    %s34 = ssub.s32 %s21, %s33
    %p35 = scmp.eq.s32.totalorder %s34, 0
    %s37 = sadd.s32 %s36, 1
    %s38 = scalar_select %p35, %s36, %s37
    %p41 = pneg %p35
    %p42 = scmp.eq.s32.totalorder %s14, 1
    %p43 = por %p41, %p42
    %p44 = scmp.ne.s32.totalorder %s36, %s39
    %p45 = scmp.eq.s32.totalorder %s14, 0
    %p46 = por %p44, %p45
    %p47 = scmp.ne.s32.totalorder %s36, %s39
    %p48 = scmp.eq.s32.totalorder %s19, 1
    %p49 = por %p47, %p48
    %p50 = scmp.ne.s32.totalorder %s39, %s40
    %p51 = scmp.eq.s32.totalorder %s19, 0
    %p52 = por %p50, %p51
    %p53 = scmp.ne.s32.totalorder %s39, %s40
    %p54 = scmp.eq.s32.totalorder %s20, 1
    %p55 = por %p53, %p54
    %p57 = scmp.ne.s32.totalorder %s40, %s56
    %p58 = scmp.eq.s32.totalorder %s20, 0
    %p59 = por %p57, %p58
    %s60 = ssub.s32 %s22, %s29
    %p61 = scmp.eq.s32.totalorder %s60, 0
    %s63 = sadd.s32 %s62, 1
    %s64 = scalar_select %p61, %s62, %s63
    %p67 = pneg %p61
    %p68 = scmp.eq.s32.totalorder %s14, 1
    %p69 = por %p67, %p68
    %p70 = scmp.ne.s32.totalorder %s62, %s65
    %p71 = scmp.eq.s32.totalorder %s14, 0
    %p72 = por %p70, %p71
    %p73 = scmp.ne.s32.totalorder %s62, %s65
    %p74 = scmp.eq.s32.totalorder %s19, 1
    %p75 = por %p73, %p74
    %p76 = scmp.ne.s32.totalorder %s65, %s66
    %p77 = scmp.eq.s32.totalorder %s19, 0
    %p78 = por %p76, %p77
    %p79 = scmp.ne.s32.totalorder %s65, %s66
    %p80 = scmp.eq.s32.totalorder %s20, 1
    %p81 = por %p79, %p80
    %p83 = scmp.ne.s32.totalorder %s66, %s82
    %p84 = scmp.eq.s32.totalorder %s20, 0
    %p85 = por %p83, %p84
    %s86 = ssub.s32 %s21, %s33
    %p87 = scmp.eq.s32.totalorder %s86, 0
    %s89 = sadd.s32 %s88, 1
    %s90 = scalar_select %p87, %s88, %s89
    %p93 = pneg %p87
    %p94 = scmp.eq.s32.totalorder %s14, 1
    %p95 = por %p93, %p94
    %p96 = scmp.ne.s32.totalorder %s88, %s91
    %p97 = scmp.eq.s32.totalorder %s14, 0
    %p98 = por %p96, %p97
    %p99 = scmp.ne.s32.totalorder %s88, %s91
    %p100 = scmp.eq.s32.totalorder %s19, 1
    %p101 = por %p99, %p100
    %p102 = scmp.ne.s32.totalorder %s91, %s92
    %p103 = scmp.eq.s32.totalorder %s19, 0
    %p104 = por %p102, %p103
    %p105 = scmp.ne.s32.totalorder %s91, %s92
    %p106 = scmp.eq.s32.totalorder %s20, 1
    %p107 = por %p105, %p106
    %p109 = scmp.ne.s32.totalorder %s92, %s108
    %p110 = scmp.eq.s32.totalorder %s20, 0
    %p111 = por %p109, %p110
    %s112 = ssub.s32 %s22, %s29
    %p113 = scmp.eq.s32.totalorder %s112, 0
    %s115 = sadd.s32 %s114, 1
    %s116 = scalar_select %p113, %s114, %s115
    %p119 = pneg %p113
    %p120 = scmp.eq.s32.totalorder %s14, 1
    %p121 = por %p119, %p120
    %p122 = scmp.ne.s32.totalorder %s114, %s117
    %p123 = scmp.eq.s32.totalorder %s14, 0
    %p124 = por %p122, %p123
    %p125 = scmp.ne.s32.totalorder %s114, %s117
    %p126 = scmp.eq.s32.totalorder %s19, 1
    %p127 = por %p125, %p126
    %p128 = scmp.ne.s32.totalorder %s117, %s118
    %p129 = scmp.eq.s32.totalorder %s19, 0
    %p130 = por %p128, %p129
    %p131 = scmp.ne.s32.totalorder %s117, %s118
    %p132 = scmp.eq.s32.totalorder %s20, 1
    %p133 = por %p131, %p132
    %p135 = scmp.ne.s32.totalorder %s118, %s134
    %p136 = scmp.eq.s32.totalorder %s20, 0
    %p137 = por %p135, %p136
    %s138 = ssub.s32 %s21, %s33
    %p139 = scmp.eq.s32.totalorder %s138, 0
    %s141 = sadd.s32 %s140, 1
    %s142 = scalar_select %p139, %s140, %s141
    %p145 = pneg %p139
    %p146 = scmp.eq.s32.totalorder %s14, 1
    %p147 = por %p145, %p146
    %p148 = scmp.ne.s32.totalorder %s140, %s143
    %p149 = scmp.eq.s32.totalorder %s14, 0
    %p150 = por %p148, %p149
    %p151 = scmp.ne.s32.totalorder %s140, %s143
    %p152 = scmp.eq.s32.totalorder %s19, 1
    %p153 = por %p151, %p152
    %p154 = scmp.ne.s32.totalorder %s143, %s144
    %p155 = scmp.eq.s32.totalorder %s19, 0
    %p156 = por %p154, %p155
    %p157 = scmp.ne.s32.totalorder %s143, %s144
    %p158 = scmp.eq.s32.totalorder %s20, 1
    %p159 = por %p157, %p158
    %p161 = scmp.ne.s32.totalorder %s144, %s160
    %p162 = scmp.eq.s32.totalorder %s20, 0
    %p163 = por %p161, %p162
    %s164 = ssub.s32 %s22, %s29
    %p165 = scmp.eq.s32.totalorder %s164, 0
    %s167 = sadd.s32 %s166, 1
    %s168 = scalar_select %p165, %s166, %s167
    %p171 = pneg %p165
    %p172 = scmp.eq.s32.totalorder %s14, 1
    %p173 = por %p171, %p172
    %p174 = scmp.ne.s32.totalorder %s166, %s169
    %p175 = scmp.eq.s32.totalorder %s14, 0
    %p176 = por %p174, %p175
    %p177 = scmp.ne.s32.totalorder %s166, %s169
    %p178 = scmp.eq.s32.totalorder %s19, 1
    %p179 = por %p177, %p178
    %p180 = scmp.ne.s32.totalorder %s169, %s170
    %p181 = scmp.eq.s32.totalorder %s19, 0
    %p182 = por %p180, %p181
    %p183 = scmp.ne.s32.totalorder %s169, %s170
    %p184 = scmp.eq.s32.totalorder %s20, 1
    %p185 = por %p183, %p184
    %p187 = scmp.ne.s32.totalorder %s170, %s186
    %p188 = scmp.eq.s32.totalorder %s20, 0
    %p189 = por %p187, %p188
    %s190 = ssub.s32 %s21, %s33
    %p191 = scmp.eq.s32.totalorder %s190, 0
    %s193 = sadd.s32 %s192, 1
    %s194 = scalar_select %p191, %s192, %s193
    %p197 = pneg %p191
    %p198 = scmp.eq.s32.totalorder %s14, 1
    %p199 = por %p197, %p198
    %p200 = scmp.ne.s32.totalorder %s192, %s195
    %p201 = scmp.eq.s32.totalorder %s14, 0
    %p202 = por %p200, %p201
    %p203 = scmp.ne.s32.totalorder %s192, %s195
    %p204 = scmp.eq.s32.totalorder %s19, 1
    %p205 = por %p203, %p204
    %p206 = scmp.ne.s32.totalorder %s195, %s196
    %p207 = scmp.eq.s32.totalorder %s19, 0
    %p208 = por %p206, %p207
    %p209 = scmp.ne.s32.totalorder %s195, %s196
    %p210 = scmp.eq.s32.totalorder %s20, 1
    %p211 = por %p209, %p210
    %p213 = scmp.ne.s32.totalorder %s196, %s212
    %p214 = scmp.eq.s32.totalorder %s20, 0
    %p215 = por %p213, %p214
    %s216 = ssub.s32 %s21, %s33
    %p217 = scmp.eq.s32.totalorder %s216, 0
    %s219 = sadd.s32 %s218, 1
    %s220 = scalar_select %p217, %s218, %s219
    %p223 = pneg %p217
    %p224 = scmp.eq.s32.totalorder %s14, 1
    %p225 = por %p223, %p224
    %p226 = scmp.ne.s32.totalorder %s218, %s221
    %p227 = scmp.eq.s32.totalorder %s14, 0
    %p228 = por %p226, %p227
    %p229 = scmp.ne.s32.totalorder %s218, %s221
    %p230 = scmp.eq.s32.totalorder %s19, 1
    %p231 = por %p229, %p230
    %p232 = scmp.ne.s32.totalorder %s221, %s222
    %p233 = scmp.eq.s32.totalorder %s19, 0
    %p234 = por %p232, %p233
    %p235 = scmp.ne.s32.totalorder %s221, %s222
    %p236 = scmp.eq.s32.totalorder %s20, 1
    %p237 = por %p235, %p236
    %p239 = scmp.ne.s32.totalorder %s222, %s238
    %p240 = scmp.eq.s32.totalorder %s20, 0
    %p241 = por %p239, %p240
    %p242 = scmp.le.s32.totalorder 1, %s14
    %p243 = scmp.lt.s32.totalorder %s14, 3
    %p244 = pnand %p242, %p243
    %p245 = pneg %p244
    // Predicated region
    $region9: #{tpu_custom_call.1} parent=5 // pred_check
      _
    $region10: #{tpu_custom_call.1} parent=5 // pred_check_branch
      %247 = sbr.rel (%p244) target = $region12
    $region11: #{tpu_custom_call.1} parent=5 // pred_region
      %s248 = ssub.s32 %s14, 1
      // Predicated region
      $region13: #{tpu_custom_call.1} parent=11 // pred_check
        %p249 = pneg %p78
      $region14: #{tpu_custom_call.1} parent=11 // pred_check_branch
        %251 = sbr.rel (%p249) target = $region16
      $region15: #{tpu_custom_call.1} parent=11 // pred_region
        %p252 = scmp.lt.s32.totalorder %s24, 0
        %s253 = scalar_select %p252, %s24, 0
        %s254 = smul.addr %s253, 8
        %s255 = scalar_lea.vmem %s1, %s254
      $region16: #{tpu_custom_call.1} parent=11 // pred_fallthru
        _
      // Predicated region
      $region17: #{tpu_custom_call.1} parent=11 // pred_check
        %p256 = pneg %p130
      $region18: #{tpu_custom_call.1} parent=11 // pred_check_branch
        %258 = sbr.rel (%p256) target = $region20
      $region19: #{tpu_custom_call.1} parent=11 // pred_region
        %p259 = scmp.lt.s32.totalorder %s24, 0
        %s260 = scalar_select %p259, %s24, 0
        %s261 = scalar_lea.vmem %s3, %s260
      $region20: #{tpu_custom_call.1} parent=11 // pred_fallthru
        _
      // Predicated region
      $region21: #{tpu_custom_call.1} parent=11 // pred_check
        %p262 = pneg %p182
      $region22: #{tpu_custom_call.1} parent=11 // pred_check_branch
        %264 = sbr.rel (%p262) target = $region24
      $region23: #{tpu_custom_call.1} parent=11 // pred_region
        %p265 = scmp.lt.s32.totalorder %s24, 0
        %s266 = scalar_select %p265, %s24, 0
        %s267 = scalar_lea.vmem %s5, %s266
      $region24: #{tpu_custom_call.1} parent=11 // pred_fallthru
        _
    $region12: #{tpu_custom_call.1} parent=5 // pred_fallthru
      _
    %p268 = scmp.lt.s32.totalorder %s14, 2
    // Predicated region
    $region25: #{tpu_custom_call.1} parent=5 // pred_check
      %p269 = pneg %p268
    $region26: #{tpu_custom_call.1} parent=5 // pred_check_branch
      %271 = sbr.rel (%p269) target = $region28
    $region27: #{tpu_custom_call.1} parent=5 // pred_region
      // Predicated region
      $region29: #{tpu_custom_call.1} parent=27 // pred_check
        %p272 = pneg %p46
      $region30: #{tpu_custom_call.1} parent=27 // pred_check_branch
        %274 = sbr.rel (%p272) target = $region32
      $region31: #{tpu_custom_call.1} parent=27 // pred_region
        %p275 = scmp.lt.s32.totalorder %s21, 1
        %s276 = scalar_select %p275, %s21, 1
        %s277 = smul.addr %s276, 8
        %s278 = scalar_lea.vmem %s0, %s277
      $region32: #{tpu_custom_call.1} parent=27 // pred_fallthru
        _
      // Predicated region
      $region33: #{tpu_custom_call.1} parent=27 // pred_check
        %p279 = pneg %p98
      $region34: #{tpu_custom_call.1} parent=27 // pred_check_branch
        %281 = sbr.rel (%p279) target = $region36
      $region35: #{tpu_custom_call.1} parent=27 // pred_region
        %p282 = scmp.lt.s32.totalorder %s21, 1
        %s283 = scalar_select %p282, %s21, 1
        %s284 = smul.addr %s283, 8
        %s285 = scalar_lea.vmem %s2, %s284
      $region36: #{tpu_custom_call.1} parent=27 // pred_fallthru
        _
      // Predicated region
      $region37: #{tpu_custom_call.1} parent=27 // pred_check
        %p286 = pneg %p150
      $region38: #{tpu_custom_call.1} parent=27 // pred_check_branch
        %288 = sbr.rel (%p286) target = $region40
      $region39: #{tpu_custom_call.1} parent=27 // pred_region
        %p289 = scmp.lt.s32.totalorder %s21, 1
        %s290 = scalar_select %p289, %s21, 1
        %s291 = smul.addr %s290, 8
        %s292 = scalar_lea.vmem %s4, %s291
      $region40: #{tpu_custom_call.1} parent=27 // pred_fallthru
        _
    $region28: #{tpu_custom_call.1} parent=5 // pred_fallthru
      _
    %p293 = scmp.le.s32.totalorder 1, %s14
    %p294 = scmp.lt.s32.totalorder %s14, 3
    %p295 = pnand %p293, %p294
    %p296 = pneg %p295
    // Predicated region
    $region41: #{tpu_custom_call.1} parent=5 // pred_check
      _
    $region42: #{tpu_custom_call.1} parent=5 // pred_check_branch
      %298 = sbr.rel (%p295) target = $region44
    $region43: #{tpu_custom_call.1} parent=5 // pred_region
      %s299 = ssub.s32 %s14, 1
      %p300 = scmp.lt.s32.totalorder %s23, 1
      %s301 = scalar_select %p300, %s23, 1
      %s302 = smul.addr %s301, 8
      %s303 = scalar_lea.vmem %s0, %s302
      %p304 = pneg %p52
      %p305 = pneg %p49
      %p306 = scmp.lt.s32.totalorder %s24, 0
      %s307 = scalar_select %p306, %s24, 0
      %s308 = smul.addr %s307, 8
      %s309 = scalar_lea.vmem %s1, %s308
      %p310 = pneg %p78
      %p311 = pneg %p75
      %p312 = scmp.lt.s32.totalorder %s23, 1
      %s313 = scalar_select %p312, %s23, 1
      %s314 = smul.addr %s313, 8
      %s315 = scalar_lea.vmem %s2, %s314
      %p316 = pneg %p104
      %p317 = pneg %p101
      %p318 = scmp.lt.s32.totalorder %s24, 0
      %s319 = scalar_select %p318, %s24, 0
      %s320 = scalar_lea.vmem %s3, %s319
      %p321 = pneg %p130
      %p322 = pneg %p127
      %p323 = scmp.lt.s32.totalorder %s23, 1
      %s324 = scalar_select %p323, %s23, 1
      %s325 = smul.addr %s324, 8
      %s326 = scalar_lea.vmem %s4, %s325
      %p327 = pneg %p156
      %p328 = pneg %p153
      %p329 = scmp.lt.s32.totalorder %s24, 0
      %s330 = scalar_select %p329, %s24, 0
      %s331 = scalar_lea.vmem %s5, %s330
      %p332 = pneg %p182
      %p333 = pneg %p179
      %p334 = pneg %p208
      %p335 = pneg %p205
      %p336 = scmp.lt.s32.totalorder %s23, 1
      %s337 = scalar_select %p336, %s23, 1
      %s338 = smul.addr %s337, 8
      %s339 = scalar_lea.vmem %s6, %s338
      %p340 = pneg %p234
      %p341 = pneg %p231
      %p342 = scmp.lt.s32.totalorder %s23, 1
      %s343 = scalar_select %p342, %s23, 1
      %s344 = smul.addr %s343, 8
      %s345 = scalar_lea.vmem %s7, %s344
      %p346 = scmp.lt.s32.totalorder %s23, 1
      %s347 = scalar_select %p346, %s23, 1
      %s348 = smul.addr %s347, 8
      %s349 = scalar_lea.vmem %s0, %s348
      %p350 = scmp.lt.s32.totalorder %s24, 0
      %s351 = scalar_select %p350, %s24, 0
      %s352 = smul.addr %s351, 8
      %s353 = scalar_lea.vmem %s1, %s352
      %p354 = scmp.lt.s32.totalorder %s23, 1
      %s355 = scalar_select %p354, %s23, 1
      %s356 = smul.addr %s355, 8
      %s357 = scalar_lea.vmem %s2, %s356
      %p358 = scmp.lt.s32.totalorder %s24, 0
      %s359 = scalar_select %p358, %s24, 0
      %s360 = scalar_lea.vmem %s3, %s359
      %p361 = scmp.lt.s32.totalorder %s23, 1
      %s362 = scalar_select %p361, %s23, 1
      %s363 = smul.addr %s362, 8
      %s364 = scalar_lea.vmem %s4, %s363
      %p365 = scmp.lt.s32.totalorder %s24, 0
      %s366 = scalar_select %p365, %s24, 0
      %s367 = scalar_lea.vmem %s5, %s366
      %p368 = scmp.lt.s32.totalorder %s23, 1
      %s369 = scalar_select %p368, %s23, 1
      %s370 = smul.addr %s369, 8
      %s371 = scalar_lea.vmem %s6, %s370
      %p372 = scmp.lt.s32.totalorder %s23, 1
      %s373 = scalar_select %p372, %s23, 1
      %s374 = smul.addr %s373, 8
      %s375 = scalar_lea.vmem %s7, %s374
      %v376 = vld [vmem:[%s349] sm:$0xff]
      %v377 = vld [vmem:[%s353] sm:$0xff]
      %v378 = vld [vmem:[%s353 + $0x8] sm:$0xff]
      %v379 = vld [vmem:[%s353 + $0x10] sm:$0xff]
      %v380 = vld [vmem:[%s353 + $0x18] sm:$0xff]
      %vm381 = vcmask 261120
      %v383 = vsel %vm381, %v376, 0
      %385 = vmatprep.subr.mxu0 0.0
      %386 = vmatpush1.msra.mxu0 %v377
      %387 = vmatprep.subr.mxu0 0.0
      %388 = vmatpush1.msra.mxu0 %v378
      %389 = vmatprep.subr.mxu0 0.0
      %390 = vmatpush1.msra.mxu0 %v379
      %391 = vmatprep.subr.mxu0 0.0
      %392 = vmatpush1.msra.mxu0 %v380
      %393 = vmatprep.subr.mxu0 0.0
      %394 = vmatpush1.msra.mxu0 0.0
      %395 = vmatprep.subr.mxu0 0.0
      %396 = vmatpush1.msra.mxu0 0.0
      %397 = vmatprep.subr.mxu0 0.0
      %398 = vmatpush1.msra.mxu0 0.0
      %399 = vmatprep.subr.mxu0 0.0
      %400 = vmatpush1.msra.mxu0 0.0
      %401 = vmatprep.subr.mxu0 0.0
      %402 = vmatpush1.msra.mxu0 0.0
      %403 = vmatprep.subr.mxu0 0.0
      %404 = vmatpush1.msra.mxu0 0.0
      %405 = vmatprep.subr.mxu0 0.0
      %406 = vmatpush1.msra.mxu0 0.0
      %407 = vmatprep.subr.mxu0 0.0
      %408 = vmatpush1.msra.mxu0 0.0
      %409 = vmatprep.subr.mxu0 0.0
      %410 = vmatpush1.msra.mxu0 0.0
      %411 = vmatprep.subr.mxu0 0.0
      %412 = vmatpush1.msra.mxu0 0.0
      %413 = vmatprep.subr.mxu0 0.0
      %414 = vmatpush1.msra.mxu0 0.0
      %415 = vmatprep.subr.mxu0 0.0
      %416 = vmatpush1.msra.mxu0 0.0
      %417 = vmatprep.subr.mxu0 0.0
      %418 = vmatpush1.msra.mxu0 0.0
      %419 = vmatprep.subr.mxu0 0.0
      %420 = vmatpush1.msra.mxu0 0.0
      %421 = vmatprep.subr.mxu0 0.0
      %422 = vmatpush1.msra.mxu0 0.0
      %423 = vmatprep.subr.mxu0 0.0
      %424 = vmatpush1.msra.mxu0 0.0
      %425 = vmatprep.subr.mxu0 0.0
      %426 = vmatpush1.msra.mxu0 0.0
      %427 = vmatprep.subr.mxu0 0.0
      %428 = vmatpush1.msra.mxu0 0.0
      %429 = vmatprep.subr.mxu0 0.0
      %430 = vmatpush1.msra.mxu0 0.0
      %431 = vmatprep.subr.mxu0 0.0
      %432 = vmatpush1.msra.mxu0 0.0
      %433 = vmatprep.subr.mxu0 0.0
      %434 = vmatpush1.msra.mxu0 0.0
      %435 = vmatprep.subr.mxu0 0.0
      %436 = vmatpush1.msra.mxu0 0.0
      %437 = vmatprep.subr.mxu0 0.0
      %438 = vmatpush1.msra.mxu0 0.0
      %439 = vmatprep.subr.mxu0 0.0
      %440 = vmatpush1.msra.mxu0 0.0
      %441 = vmatprep.subr.mxu0 0.0
      %442 = vmatpush1.msra.mxu0 0.0
      %443 = vmatprep.subr.mxu0 0.0
      %444 = vmatpush1.msra.mxu0 0.0
      %445 = vmatprep.subr.mxu0 0.0
      %446 = vmatpush1.msra.mxu0 0.0
      %447 = vmatprep.subr.mxu0 0.0
      %448 = vmatpush1.msra.mxu0 0.0
      %449 = vmatprep.mubr.f32.mxu0 0.0
      %450 = vmatmul.mubr.f32.gmra.mrb[0].mxu0 %v383
      %v451 = vpop.f32.mrb[0].mxu0
      %v452 = vadd.f32 0.0, %v451
      %v453 = vpop.f32.mrb[0].mxu0
      %454 = vdwg.mxu0
      %v455 = vld [vmem:[%s357] sm:$0xff]
      %v456 = vld [vmem:[%s360] sm:$0x1]
      %458 = vset.pattern.permute.xlu0 0
      %459 = vperm.xlu0 %458, %v455
      %v460 = vpop.permute.xlu0 %459
      %v463 = vlaneseq
      %v464 = vshrl.u32 %v463, 7
      %v465 = vsub.s32 0, %v464
      %v466 = vrot.slane %v456, %v465
      %v468 = vadd.f32 %v460, %v466
      %v469 = vmul.f32 %v452, 2.0
      %v470 = vsub.f32 %v468, %v469
      %v471 = vmax.f32 %v470, 0.0
      %v472 = vrsqrt.pop %v471
      %v473 = vmul.f32 %v471, %v472
      %vm474 = vcmp.eq.f32.partialorder %v471, inf
      %v475 = vsel %vm474, %v471, %v473
      %vm476 = vcmp.eq.f32.partialorder %v471, 0.0
      %v477 = vand.u32 %v471, 2147483648
      %v478 = vsel %vm476, %v477, %v475
      %v479 = vlaneseq
      %v480 = vshrl.u32 %v479, 7
      %s481 = smul.u32 %s23, 8
      %v482 = vstv %s481
      %v483 = vadd.s32 %v480, %v482
      %v484 = vlaneseq
      %v485 = vand.u32 %v484, 127
      %s486 = smul.u32 %s24, 16
      %v487 = vstv %s486
      %v488 = vadd.s32 %v485, %v487
      %v489 = vld [vmem:[%s364] sm:$0xff]
      %v490 = vld [vmem:[%s367] sm:$0x1]
      %491 = vset.pattern.permute.xlu0 0
      %492 = vperm.xlu0 %491, %v489
      %v493 = vpop.permute.xlu0 %492
      %v494 = vlaneseq
      %v495 = vshrl.u32 %v494, 7
      %v496 = vsub.s32 0, %v495
      %v497 = vrot.slane %v490, %v496
      %vm498 = vcmp.eq.s32.totalorder %v493, %v497
      %vm499 = vcmp.ne.s32.totalorder %v483, %v488
      %vm500 = vmand %vm498, %vm499
      %v501 = vsel %vm500, %v478, 0.0
      %vm502 = vcmask 130048
      %v503 = vsel %vm502, %v501, -inf
      %504 = vmax.xlane.f32.xlu0 %v503
      %v505 = vpop.xlane.xlu0 %504
      %v506 = vsel %vm502, %v478, 0.0
      %507 = vadd.xlane.f32.xlu0 %v506
      %v508 = vpop.xlane.xlu0 %507
      %p509 = scmp.eq.s32.totalorder %s24, 0
      // Predicated region
      $region45: #{tpu_custom_call.1} parent=43 // pred_check
        %p510 = pneg %p509
      $region46: #{tpu_custom_call.1} parent=43 // pred_check_branch
        %512 = sbr.rel (%p510) target = $region48
      $region47: #{tpu_custom_call.1} parent=43 // pred_region
        %vm513 = vcmask 7168
        %514 = vst.msk [vmem:[%s371] sm:$0xff] %vm513, 0.0
        %515 = vst.msk [vmem:[%s375] sm:$0xff] %vm513, 0.0
      $region48: #{tpu_custom_call.1} parent=43 // pred_fallthru
        _
      %v516 = vld [vmem:[%s371] sm:$0xff]
      %v517 = vmax.f32 %v516, %v505
      %vm518 = vcmask 7168
      %519 = vst.msk [vmem:[%s371] sm:$0xff] %vm518, %v517
      %v520 = vld [vmem:[%s375] sm:$0xff]
      %v521 = vadd.f32 %v520, %v508
      %522 = vst.msk [vmem:[%s375] sm:$0xff] %vm518, %v521
      %p523 = scmp.lt.s32.totalorder %s23, 1
      %s524 = scalar_select %p523, %s23, 1
      %s525 = smul.addr %s524, 8
      %s526 = scalar_lea.vmem %s6, %s525
      %p527 = scmp.lt.s32.totalorder %s23, 1
      %s528 = scalar_select %p527, %s23, 1
      %s529 = smul.addr %s528, 8
      %s530 = scalar_lea.vmem %s7, %s529
      // Predicated region
      $region49: #{tpu_custom_call.1} parent=43 // pred_check
        %p531 = pneg %p205
      $region50: #{tpu_custom_call.1} parent=43 // pred_check_branch
        %533 = sbr.rel (%p531) target = $region52
      $region51: #{tpu_custom_call.1} parent=43 // pred_region
        _
      $region52: #{tpu_custom_call.1} parent=43 // pred_fallthru
        _
      // Predicated region
      $region53: #{tpu_custom_call.1} parent=43 // pred_check
        %p534 = pneg %p231
      $region54: #{tpu_custom_call.1} parent=43 // pred_check_branch
        %536 = sbr.rel (%p534) target = $region56
      $region55: #{tpu_custom_call.1} parent=43 // pred_region
        _
      $region56: #{tpu_custom_call.1} parent=43 // pred_fallthru
        _
    $region44: #{tpu_custom_call.1} parent=5 // pred_fallthru
      _
    %p537 = scmp.le.s32.totalorder 2, %s14
    // Predicated region
    $region57: #{tpu_custom_call.1} parent=5 // pred_check
      %p538 = pneg %p537
    $region58: #{tpu_custom_call.1} parent=5 // pred_check_branch
      %540 = sbr.rel (%p538) target = $region60
    $region59: #{tpu_custom_call.1} parent=5 // pred_region
      %s541 = ssub.s32 %s14, 2
      // Predicated region
      $region61: #{tpu_custom_call.1} parent=59 // pred_check
        %p542 = pneg %p211
      $region62: #{tpu_custom_call.1} parent=59 // pred_check_branch
        %544 = sbr.rel (%p542) target = $region64
      $region63: #{tpu_custom_call.1} parent=59 // pred_region
        %p545 = scmp.lt.s32.totalorder %s25, 1
        %s546 = scalar_select %p545, %s25, 1
        %s547 = smul.addr %s546, 8
        %s548 = scalar_lea.vmem %s6, %s547
      $region64: #{tpu_custom_call.1} parent=59 // pred_fallthru
        _
      // Predicated region
      $region65: #{tpu_custom_call.1} parent=59 // pred_check
        %p549 = pneg %p237
      $region66: #{tpu_custom_call.1} parent=59 // pred_check_branch
        %551 = sbr.rel (%p549) target = $region68
      $region67: #{tpu_custom_call.1} parent=59 // pred_region
        %p552 = scmp.lt.s32.totalorder %s25, 1
        %s553 = scalar_select %p552, %s25, 1
        %s554 = smul.addr %s553, 8
        %s555 = scalar_lea.vmem %s7, %s554
      $region68: #{tpu_custom_call.1} parent=59 // pred_fallthru
        _
    $region60: #{tpu_custom_call.1} parent=5 // pred_fallthru
      _
  $region6: #{tpu_custom_call.1} parent=0 // loop_footer
    %s18 = sadd.s32 1, %s14
  $region7: #{tpu_custom_call.1} parent=0 // loop_footer_branch
    %13 = sbr.rel target = $region3
  $region8: #{tpu_custom_call.1} parent=0 // loop_exit
    _

</llo_original>
